<compile_context>
chip_gen: v7x
topology: tpu7x:2x2x1
jax: 0.10.0
libtpu: 0.0.40
codegen_flags: <defaults>
</compile_context>

<pallas_src>
import functools

import jax
import jax.numpy as jnp
from jax.experimental import pallas as pl
from jax.experimental.pallas import tpu as pltpu


def spatial_attention_kernel(w_ref, x_ref, o_ref, *, H, W):
    # w_ref : SMEM (18,) f32  conv weight, index = ic*9 + ky*3 + kx
    #         (channel-0 "avg" taps are pre-scaled by 1/C in the wrapper)
    # x_ref : VMEM (NB, C, H*W) input block (NB batch elements, lane-dense)
    # o_ref : VMEM (NB, H*W)    output block = sigmoid(conv([avg, max]))
    NB, C, HW = x_ref.shape

    # Channel reductions, one (NB, HW) slab at a time: keeps the live working
    # set O(NB*HW) instead of a full (NB, C, HW) f32 copy; the max runs in the
    # input dtype (exact) and is widened once at the end.
    x0 = x_ref[:, 0, :]
    s = x0.astype(jnp.float32)
    mx = x0
    for c in range(1, C):
        xc = x_ref[:, c, :]
        s = s + xc.astype(jnp.float32)
        mx = jnp.maximum(mx, xc)
    mx = mx.astype(jnp.float32)

    # Zero-padding validity masks (f32 0/1), built ONCE: 4 edges + 4 corners.
    pos = jax.lax.broadcasted_iota(jnp.int32, (NB, HW), 1)
    col = pos % W
    left = (col > 0).astype(jnp.float32)            # dx = -1 valid
    right = (col < (W - 1)).astype(jnp.float32)     # dx = +1 valid
    top = (pos >= W).astype(jnp.float32)            # dy = -1 valid
    bot = (pos < (H - 1) * W).astype(jnp.float32)   # dy = +1 valid
    mask = {
        (-1, -1): top * left, (-1, 0): top, (-1, 1): top * right,
        (0, -1): left,        (0, 0): None, (0, 1): right,
        (1, -1): bot * left,  (1, 0): bot,  (1, 1): bot * right,
    }

    # Stack sum & max along the sublane axis so each tap offset needs a single
    # XLU roll (NB is a multiple of 8, so the half-slices are tile-aligned).
    sm = jnp.concatenate([s, mx], axis=0)           # (2*NB, HW)

    acc = jnp.zeros((NB, HW), jnp.float32)
    for ky in range(3):
        dy = ky - 1
        for kx in range(3):
            dx = kx - 1
            off = dy * W + dx                       # flattened source offset
            shift = (-off) % HW                     # roll source onto dst
            g = pltpu.roll(sm, shift, 1) if shift else sm
            tap = (w_ref[ky * 3 + kx] * g[:NB, :]
                   + w_ref[9 + ky * 3 + kx] * g[NB:, :])
            m = mask[(dy, dx)]
            if m is not None:
                tap = tap * m
            acc = acc + tap

    o_ref[...] = jax.nn.sigmoid(acc).astype(o_ref.dtype)


def _vmem_capacity_bytes():
    try:
        return int(pltpu.get_tpu_info().vmem_capacity_bytes)
    except Exception:
        return 64 << 20  # conservative: v7x per-TensorCore VMEM


def _plan_blocks(n, c, hw, itemsize):
    """Pick (NB, N_pad, vmem_limit_bytes) for the batch-blocked pipeline."""
    vmem_cap = _vmem_capacity_bytes()

    # Bytes resident per batch sample inside the pipeline: double-buffered
    # input + double-buffered output + in-kernel f32 temporaries (sum, max,
    # stacked/rolled taps, masks, accumulator).
    per_in = c * hw * itemsize
    per_out = hw * itemsize
    per_tmp = 20 * hw * 4
    per_sample = 2 * per_in + 2 * per_out + per_tmp

    # Input-block target: ~8 MiB on 128-MiB-VMEM chips (v5e/v6e), ~5 MiB on
    # v7x (64 MiB per TensorCore); never exceed ~35% of physical VMEM once
    # double-buffering + temps are counted.
    tgt_in = (8 << 20) if vmem_cap >= (96 << 20) else (5 << 20)
    nb_tgt = max(8, (tgt_in // per_in) // 8 * 8)
    nb_cap = max(8, (int(vmem_cap * 0.35) // per_sample) // 8 * 8)
    nb = min(nb_tgt, nb_cap)

    # Keep several grid steps (DMA/compute overlap; "parallel" batch axis can
    # be split across TensorCores) whenever the padded batch is big enough.
    n8 = -(-n // 8) * 8
    if n8 >= 32:
        desired_steps = 4
    elif n8 >= 16:
        desired_steps = 2
    else:
        desired_steps = 1
    nb = min(nb, max(8, (n8 // desired_steps) // 8 * 8))
    nb = min(nb, n8)

    n_pad = -(-n8 // nb) * nb

    need = nb * per_sample + (2 << 20)
    vmem_limit = int(min(max(need, 32 << 20), vmem_cap - (8 << 20)))
    return nb, n_pad, vmem_limit


@jax.jit
def spatial_attention(x, w):
    """x: (N, C, H, W); w: (1, 2, 3, 3) conv weight (OIHW). Returns (N, 1, H, W)."""
    N, C, H, W = x.shape
    HW = H * W
    # TODO(synk): for H*W < 128 fold batch into the lane axis as well
    # (lane-sparse stores otherwise); fine for the spatial maps used here.

    # Lane-dense layout: put H*W on the lane axis (row-major => free reshape).
    x3 = x.reshape(N, C, HW)

    # Fold the 1/C of the channel mean into the "avg" (input-channel 0) taps.
    w_f = w.astype(jnp.float32)
    w_f = w_f.at[:, 0, :, :].multiply(1.0 / C)
    w_flat = w_f.reshape(-1)                      # (18,) index = ic*9 + ky*3 + kx

    NB, N_pad, vmem_limit = _plan_blocks(N, C, HW, x.dtype.itemsize)
    if N_pad != N:
        x3 = jnp.pad(x3, ((0, N_pad - N), (0, 0), (0, 0)))

    grid = (N_pad // NB,)

    out2 = pl.pallas_call(
        functools.partial(spatial_attention_kernel, H=H, W=W),
        out_shape=jax.ShapeDtypeStruct((N_pad, HW), x.dtype),
        grid=grid,
        in_specs=[
            pl.BlockSpec(memory_space=pltpu.MemorySpace.SMEM),   # conv weights
            pl.BlockSpec((NB, C, HW), lambda b: (b, 0, 0)),      # x block
        ],
        out_specs=pl.BlockSpec((NB, HW), lambda b: (b, 0)),
        compiler_params=pltpu.CompilerParams(
            dimension_semantics=("parallel",),                   # batch independent
            vmem_limit_bytes=vmem_limit),
    )(w_flat, x3)

    return out2[:N].reshape(N, 1, H, W)


def spatial_attention_ref(x, w):
    """Pure-JAX reference matching the PyTorch module."""
    avg = jnp.mean(x, axis=1, keepdims=True)
    mx = jnp.max(x, axis=1, keepdims=True)
    f = jnp.concatenate([avg, mx], axis=1)          # (N, 2, H, W)
    y = jax.lax.conv_general_dilated(
        f, w, window_strides=(1, 1), padding=((1, 1), (1, 1)),
        dimension_numbers=("NCHW", "OIHW", "NCHW"))
    return jax.nn.sigmoid(y)


if __name__ == "__main__":
    key = jax.random.PRNGKey(0)
    k_x, k_w, k_x2, k_w2 = jax.random.split(key, 4)

    # Test 1: small shapes consistent with the module: batch=2, channels=4, 16x16.
    N, C, H, W = 2, 4, 16, 16
    x = jax.random.normal(k_x, (N, C, H, W), dtype=jnp.float32)
    fan_in = 2 * 3 * 3
    w = jax.random.normal(k_w, (1, 2, 3, 3), dtype=jnp.float32) / jnp.sqrt(fan_in)

    out = jax.block_until_ready(spatial_attention(x, w))
    ref = spatial_attention_ref(x, w)
    assert out.shape == (N, 1, H, W)
    assert jnp.allclose(out, ref, atol=1e-5, rtol=1e-5), float(
        jnp.max(jnp.abs(out - ref)))

    # Test 2: non-square spatial map (guards the dy*W row-offset / mask math).
    N2, C2, H2, W2 = 2, 3, 8, 16
    x2 = jax.random.normal(k_x2, (N2, C2, H2, W2), dtype=jnp.float32)
    w2 = jax.random.normal(k_w2, (1, 2, 3, 3), dtype=jnp.float32) / jnp.sqrt(fan_in)

    out2 = jax.block_until_ready(spatial_attention(x2, w2))
    ref2 = spatial_attention_ref(x2, w2)
    assert out2.shape == (N2, 1, H2, W2)
    assert jnp.allclose(out2, ref2, atol=1e-5, rtol=1e-5), float(
        jnp.max(jnp.abs(out2 - ref2)))

    print("KERNEL_OK")
</pallas_src>

<mosaic_0001>
module attributes {stable_mosaic.version = 11 : i64} {
  func.func @spatial_attention_kernel(%arg0: i32, %arg1: memref<18xf32, #tpu.memory_space<smem>>, %arg2: memref<8x4x256xf32, #tpu.memory_space<vmem>>, %arg3: memref<8x256xf32, #tpu.memory_space<vmem>>) attributes {dimension_semantics = [#tpu.dimension_semantics<parallel>], iteration_bounds = array<i64: 1>, scalar_prefetch = 0 : i64, scratch_operands = 0 : i64, tpu.core_type = #tpu.core_type<tc>, window_params = [{transform_indices = @transform_0, window_bounds = array<i64: 18>}, {transform_indices = @transform_1, window_bounds = array<i64: 8, 4, 256>}, {transform_indices = @transform_2, window_bounds = array<i64: 8, 256>}]} {
    %c0 = arith.constant 0 : index
    %c0_0 = arith.constant 0 : index
    %c0_1 = arith.constant 0 : index
    %0 = vector.load %arg2[%c0, %c0_0, %c0_1] : memref<8x4x256xf32, #tpu.memory_space<vmem>>, vector<8x1x256xf32>
    %1 = vector.shape_cast %0 : vector<8x1x256xf32> to vector<8x256xf32>
    %c0_2 = arith.constant 0 : index
    %c1 = arith.constant 1 : index
    %c0_3 = arith.constant 0 : index
    %2 = vector.load %arg2[%c0_2, %c1, %c0_3] : memref<8x4x256xf32, #tpu.memory_space<vmem>>, vector<8x1x256xf32>
    %3 = vector.shape_cast %2 : vector<8x1x256xf32> to vector<8x256xf32>
    %4 = arith.addf %1, %3 : vector<8x256xf32>
    %5 = arith.maximumf %1, %3 : vector<8x256xf32>
    %c0_4 = arith.constant 0 : index
    %c2 = arith.constant 2 : index
    %c0_5 = arith.constant 0 : index
    %6 = vector.load %arg2[%c0_4, %c2, %c0_5] : memref<8x4x256xf32, #tpu.memory_space<vmem>>, vector<8x1x256xf32>
    %7 = vector.shape_cast %6 : vector<8x1x256xf32> to vector<8x256xf32>
    %8 = arith.addf %4, %7 : vector<8x256xf32>
    %9 = arith.maximumf %5, %7 : vector<8x256xf32>
    %c0_6 = arith.constant 0 : index
    %c3 = arith.constant 3 : index
    %c0_7 = arith.constant 0 : index
    %10 = vector.load %arg2[%c0_6, %c3, %c0_7] : memref<8x4x256xf32, #tpu.memory_space<vmem>>, vector<8x1x256xf32>
    %11 = vector.shape_cast %10 : vector<8x1x256xf32> to vector<8x256xf32>
    %12 = arith.addf %8, %11 : vector<8x256xf32>
    %13 = arith.maximumf %9, %11 : vector<8x256xf32>
    %14 = tpu.iota {dimensions = array<i32: 1>} : vector<8x256xi32>
    %c16_i32 = arith.constant 16 : i32
    %c0_i32 = arith.constant 0 : i32
    %15 = arith.cmpi eq, %c16_i32, %c0_i32 : i32
    %c1_i32 = arith.constant 1 : i32
    %16 = arith.select %15, %c1_i32, %c16_i32 : i32
    %17 = vector.broadcast %16 : i32 to vector<8x256xi32>
    %18 = arith.remsi %14, %17 : vector<8x256xi32>
    %c0_i32_8 = arith.constant 0 : i32
    %19 = vector.broadcast %c0_i32_8 : i32 to vector<8x256xi32>
    %20 = arith.cmpi ne, %18, %19 : vector<8x256xi32>
    %c0_i32_9 = arith.constant 0 : i32
    %21 = vector.broadcast %c0_i32_9 : i32 to vector<8x256xi32>
    %22 = arith.cmpi slt, %18, %21 : vector<8x256xi32>
    %c0_i32_10 = arith.constant 0 : i32
    %23 = arith.cmpi slt, %16, %c0_i32_10 : i32
    %24 = vector.broadcast %23 : i1 to vector<8x256xi1>
    %25 = vector.broadcast %24 : vector<8x256xi1> to vector<8x256xi1>
    %26 = arith.xori %22, %25 : vector<8x256xi1>
    %27 = arith.andi %26, %20 : vector<8x256xi1>
    %28 = vector.broadcast %16 : i32 to vector<8x256xi32>
    %29 = arith.addi %18, %28 : vector<8x256xi32>
    %30 = arith.select %27, %29, %18 : vector<8x256xi1>, vector<8x256xi32>
    %c0_i32_11 = arith.constant 0 : i32
    %31 = vector.broadcast %c0_i32_11 : i32 to vector<8x256xi32>
    %32 = arith.cmpi sgt, %30, %31 : vector<8x256xi32>
    %33 = arith.extui %32 : vector<8x256xi1> to vector<8x256xi32>
    %34 = arith.sitofp %33 : vector<8x256xi32> to vector<8x256xf32>
    %c15_i32 = arith.constant 15 : i32
    %35 = vector.broadcast %c15_i32 : i32 to vector<8x256xi32>
    %36 = arith.cmpi slt, %30, %35 : vector<8x256xi32>
    %37 = arith.extui %36 : vector<8x256xi1> to vector<8x256xi32>
    %38 = arith.sitofp %37 : vector<8x256xi32> to vector<8x256xf32>
    %c16_i32_12 = arith.constant 16 : i32
    %39 = vector.broadcast %c16_i32_12 : i32 to vector<8x256xi32>
    %40 = arith.cmpi sge, %14, %39 : vector<8x256xi32>
    %41 = arith.extui %40 : vector<8x256xi1> to vector<8x256xi32>
    %42 = arith.sitofp %41 : vector<8x256xi32> to vector<8x256xf32>
    %c240_i32 = arith.constant 240 : i32
    %43 = vector.broadcast %c240_i32 : i32 to vector<8x256xi32>
    %44 = arith.cmpi slt, %14, %43 : vector<8x256xi32>
    %45 = arith.extui %44 : vector<8x256xi1> to vector<8x256xi32>
    %46 = arith.sitofp %45 : vector<8x256xi32> to vector<8x256xf32>
    %47 = arith.mulf %42, %34 : vector<8x256xf32>
    %48 = arith.mulf %42, %38 : vector<8x256xf32>
    %49 = arith.mulf %46, %34 : vector<8x256xf32>
    %50 = arith.mulf %46, %38 : vector<8x256xf32>
    %51 = tpu.concatenate %12, %13 in 0 : vector<8x256xf32>, vector<8x256xf32> -> vector<16x256xf32>
    %cst = arith.constant 0.000000e+00 : f32
    %52 = vector.broadcast %cst : f32 to vector<8x256xf32>
    %c17_i32 = arith.constant 17 : i32
    %53 = tpu.dynamic_rotate %51 by %c17_i32 dim 1 : vector<16x256xf32>, i32 -> vector<16x256xf32>
    %c0_13 = arith.constant 0 : index
    %54 = memref.load %arg1[%c0_13] : memref<18xf32, #tpu.memory_space<smem>>
    %55 = vector.extract_strided_slice %53 {offsets = [0, 0], sizes = [8, 256], strides = [1, 1]} : vector<16x256xf32> to vector<8x256xf32>
    %56 = vector.broadcast %54 : f32 to vector<8x256xf32>
    %57 = arith.mulf %56, %55 : vector<8x256xf32>
    %c9 = arith.constant 9 : index
    %58 = memref.load %arg1[%c9] : memref<18xf32, #tpu.memory_space<smem>>
    %59 = vector.extract_strided_slice %53 {offsets = [8, 0], sizes = [8, 256], strides = [1, 1]} : vector<16x256xf32> to vector<8x256xf32>
    %60 = vector.broadcast %58 : f32 to vector<8x256xf32>
    %61 = arith.mulf %60, %59 : vector<8x256xf32>
    %62 = arith.addf %57, %61 : vector<8x256xf32>
    %63 = arith.mulf %62, %47 : vector<8x256xf32>
    %64 = arith.addf %52, %63 : vector<8x256xf32>
    %c16_i32_14 = arith.constant 16 : i32
    %65 = tpu.dynamic_rotate %51 by %c16_i32_14 dim 1 : vector<16x256xf32>, i32 -> vector<16x256xf32>
    %c1_15 = arith.constant 1 : index
    %66 = memref.load %arg1[%c1_15] : memref<18xf32, #tpu.memory_space<smem>>
    %67 = vector.extract_strided_slice %65 {offsets = [0, 0], sizes = [8, 256], strides = [1, 1]} : vector<16x256xf32> to vector<8x256xf32>
    %68 = vector.broadcast %66 : f32 to vector<8x256xf32>
    %69 = arith.mulf %68, %67 : vector<8x256xf32>
    %c10 = arith.constant 10 : index
    %70 = memref.load %arg1[%c10] : memref<18xf32, #tpu.memory_space<smem>>
    %71 = vector.extract_strided_slice %65 {offsets = [8, 0], sizes = [8, 256], strides = [1, 1]} : vector<16x256xf32> to vector<8x256xf32>
    %72 = vector.broadcast %70 : f32 to vector<8x256xf32>
    %73 = arith.mulf %72, %71 : vector<8x256xf32>
    %74 = arith.addf %69, %73 : vector<8x256xf32>
    %75 = arith.mulf %74, %42 : vector<8x256xf32>
    %76 = arith.addf %64, %75 : vector<8x256xf32>
    %c15_i32_16 = arith.constant 15 : i32
    %77 = tpu.dynamic_rotate %51 by %c15_i32_16 dim 1 : vector<16x256xf32>, i32 -> vector<16x256xf32>
    %c2_17 = arith.constant 2 : index
    %78 = memref.load %arg1[%c2_17] : memref<18xf32, #tpu.memory_space<smem>>
    %79 = vector.extract_strided_slice %77 {offsets = [0, 0], sizes = [8, 256], strides = [1, 1]} : vector<16x256xf32> to vector<8x256xf32>
    %80 = vector.broadcast %78 : f32 to vector<8x256xf32>
    %81 = arith.mulf %80, %79 : vector<8x256xf32>
    %c11 = arith.constant 11 : index
    %82 = memref.load %arg1[%c11] : memref<18xf32, #tpu.memory_space<smem>>
    %83 = vector.extract_strided_slice %77 {offsets = [8, 0], sizes = [8, 256], strides = [1, 1]} : vector<16x256xf32> to vector<8x256xf32>
    %84 = vector.broadcast %82 : f32 to vector<8x256xf32>
    %85 = arith.mulf %84, %83 : vector<8x256xf32>
    %86 = arith.addf %81, %85 : vector<8x256xf32>
    %87 = arith.mulf %86, %48 : vector<8x256xf32>
    %88 = arith.addf %76, %87 : vector<8x256xf32>
    %c1_i32_18 = arith.constant 1 : i32
    %89 = tpu.dynamic_rotate %51 by %c1_i32_18 dim 1 : vector<16x256xf32>, i32 -> vector<16x256xf32>
    %c3_19 = arith.constant 3 : index
    %90 = memref.load %arg1[%c3_19] : memref<18xf32, #tpu.memory_space<smem>>
    %91 = vector.extract_strided_slice %89 {offsets = [0, 0], sizes = [8, 256], strides = [1, 1]} : vector<16x256xf32> to vector<8x256xf32>
    %92 = vector.broadcast %90 : f32 to vector<8x256xf32>
    %93 = arith.mulf %92, %91 : vector<8x256xf32>
    %c12 = arith.constant 12 : index
    %94 = memref.load %arg1[%c12] : memref<18xf32, #tpu.memory_space<smem>>
    %95 = vector.extract_strided_slice %89 {offsets = [8, 0], sizes = [8, 256], strides = [1, 1]} : vector<16x256xf32> to vector<8x256xf32>
    %96 = vector.broadcast %94 : f32 to vector<8x256xf32>
    %97 = arith.mulf %96, %95 : vector<8x256xf32>
    %98 = arith.addf %93, %97 : vector<8x256xf32>
    %99 = arith.mulf %98, %34 : vector<8x256xf32>
    %100 = arith.addf %88, %99 : vector<8x256xf32>
    %c4 = arith.constant 4 : index
    %101 = memref.load %arg1[%c4] : memref<18xf32, #tpu.memory_space<smem>>
    %102 = vector.extract_strided_slice %51 {offsets = [0, 0], sizes = [8, 256], strides = [1, 1]} : vector<16x256xf32> to vector<8x256xf32>
    %103 = vector.broadcast %101 : f32 to vector<8x256xf32>
    %104 = arith.mulf %103, %102 : vector<8x256xf32>
    %c13 = arith.constant 13 : index
    %105 = memref.load %arg1[%c13] : memref<18xf32, #tpu.memory_space<smem>>
    %106 = vector.extract_strided_slice %51 {offsets = [8, 0], sizes = [8, 256], strides = [1, 1]} : vector<16x256xf32> to vector<8x256xf32>
    %107 = vector.broadcast %105 : f32 to vector<8x256xf32>
    %108 = arith.mulf %107, %106 : vector<8x256xf32>
    %109 = arith.addf %104, %108 : vector<8x256xf32>
    %110 = arith.addf %100, %109 : vector<8x256xf32>
    %c255_i32 = arith.constant 255 : i32
    %111 = tpu.dynamic_rotate %51 by %c255_i32 dim 1 : vector<16x256xf32>, i32 -> vector<16x256xf32>
    %c5 = arith.constant 5 : index
    %112 = memref.load %arg1[%c5] : memref<18xf32, #tpu.memory_space<smem>>
    %113 = vector.extract_strided_slice %111 {offsets = [0, 0], sizes = [8, 256], strides = [1, 1]} : vector<16x256xf32> to vector<8x256xf32>
    %114 = vector.broadcast %112 : f32 to vector<8x256xf32>
    %115 = arith.mulf %114, %113 : vector<8x256xf32>
    %c14 = arith.constant 14 : index
    %116 = memref.load %arg1[%c14] : memref<18xf32, #tpu.memory_space<smem>>
    %117 = vector.extract_strided_slice %111 {offsets = [8, 0], sizes = [8, 256], strides = [1, 1]} : vector<16x256xf32> to vector<8x256xf32>
    %118 = vector.broadcast %116 : f32 to vector<8x256xf32>
    %119 = arith.mulf %118, %117 : vector<8x256xf32>
    %120 = arith.addf %115, %119 : vector<8x256xf32>
    %121 = arith.mulf %120, %38 : vector<8x256xf32>
    %122 = arith.addf %110, %121 : vector<8x256xf32>
    %c241_i32 = arith.constant 241 : i32
    %123 = tpu.dynamic_rotate %51 by %c241_i32 dim 1 : vector<16x256xf32>, i32 -> vector<16x256xf32>
    %c6 = arith.constant 6 : index
    %124 = memref.load %arg1[%c6] : memref<18xf32, #tpu.memory_space<smem>>
    %125 = vector.extract_strided_slice %123 {offsets = [0, 0], sizes = [8, 256], strides = [1, 1]} : vector<16x256xf32> to vector<8x256xf32>
    %126 = vector.broadcast %124 : f32 to vector<8x256xf32>
    %127 = arith.mulf %126, %125 : vector<8x256xf32>
    %c15 = arith.constant 15 : index
    %128 = memref.load %arg1[%c15] : memref<18xf32, #tpu.memory_space<smem>>
    %129 = vector.extract_strided_slice %123 {offsets = [8, 0], sizes = [8, 256], strides = [1, 1]} : vector<16x256xf32> to vector<8x256xf32>
    %130 = vector.broadcast %128 : f32 to vector<8x256xf32>
    %131 = arith.mulf %130, %129 : vector<8x256xf32>
    %132 = arith.addf %127, %131 : vector<8x256xf32>
    %133 = arith.mulf %132, %49 : vector<8x256xf32>
    %134 = arith.addf %122, %133 : vector<8x256xf32>
    %c240_i32_20 = arith.constant 240 : i32
    %135 = tpu.dynamic_rotate %51 by %c240_i32_20 dim 1 : vector<16x256xf32>, i32 -> vector<16x256xf32>
    %c7 = arith.constant 7 : index
    %136 = memref.load %arg1[%c7] : memref<18xf32, #tpu.memory_space<smem>>
    %137 = vector.extract_strided_slice %135 {offsets = [0, 0], sizes = [8, 256], strides = [1, 1]} : vector<16x256xf32> to vector<8x256xf32>
    %138 = vector.broadcast %136 : f32 to vector<8x256xf32>
    %139 = arith.mulf %138, %137 : vector<8x256xf32>
    %c16 = arith.constant 16 : index
    %140 = memref.load %arg1[%c16] : memref<18xf32, #tpu.memory_space<smem>>
    %141 = vector.extract_strided_slice %135 {offsets = [8, 0], sizes = [8, 256], strides = [1, 1]} : vector<16x256xf32> to vector<8x256xf32>
    %142 = vector.broadcast %140 : f32 to vector<8x256xf32>
    %143 = arith.mulf %142, %141 : vector<8x256xf32>
    %144 = arith.addf %139, %143 : vector<8x256xf32>
    %145 = arith.mulf %144, %46 : vector<8x256xf32>
    %146 = arith.addf %134, %145 : vector<8x256xf32>
    %c239_i32 = arith.constant 239 : i32
    %147 = tpu.dynamic_rotate %51 by %c239_i32 dim 1 : vector<16x256xf32>, i32 -> vector<16x256xf32>
    %c8 = arith.constant 8 : index
    %148 = memref.load %arg1[%c8] : memref<18xf32, #tpu.memory_space<smem>>
    %149 = vector.extract_strided_slice %147 {offsets = [0, 0], sizes = [8, 256], strides = [1, 1]} : vector<16x256xf32> to vector<8x256xf32>
    %150 = vector.broadcast %148 : f32 to vector<8x256xf32>
    %151 = arith.mulf %150, %149 : vector<8x256xf32>
    %c17 = arith.constant 17 : index
    %152 = memref.load %arg1[%c17] : memref<18xf32, #tpu.memory_space<smem>>
    %153 = vector.extract_strided_slice %147 {offsets = [8, 0], sizes = [8, 256], strides = [1, 1]} : vector<16x256xf32> to vector<8x256xf32>
    %154 = vector.broadcast %152 : f32 to vector<8x256xf32>
    %155 = arith.mulf %154, %153 : vector<8x256xf32>
    %156 = arith.addf %151, %155 : vector<8x256xf32>
    %157 = arith.mulf %156, %50 : vector<8x256xf32>
    %158 = arith.addf %146, %157 : vector<8x256xf32>
    %159 = arith.negf %158 : vector<8x256xf32>
    %160 = math.exp %159 : vector<8x256xf32>
    %cst_21 = arith.constant 1.000000e+00 : f32
    %161 = vector.broadcast %cst_21 : f32 to vector<8x256xf32>
    %162 = arith.addf %161, %160 : vector<8x256xf32>
    %163 = arith.divf %161, %162 : vector<8x256xf32>
    %c0_22 = arith.constant 0 : index
    %c0_23 = arith.constant 0 : index
    %164 = vector.load %arg3[%c0_22, %c0_23] : memref<8x256xf32, #tpu.memory_space<vmem>>, vector<8x256xf32>
    tpu.vector_store %arg3[%c0_22, %c0_23], %163 {strides = array<i32>} : memref<8x256xf32, #tpu.memory_space<vmem>>, vector<8x256xf32>,
    return
  }
  func.func @transform_0(%arg0: i32) -> i32 {
    %c0_i32 = arith.constant 0 : i32
    %c0_i32_0 = arith.constant 0 : i32
    return %c0_i32 : i32
  }
  func.func @transform_1(%arg0: i32) -> (i32, i32, i32) {
    %c0_i32 = arith.constant 0 : i32
    %c0_i32_0 = arith.constant 0 : i32
    %c0_i32_1 = arith.constant 0 : i32
    return %arg0, %c0_i32, %c0_i32_0 : i32, i32, i32
  }
  func.func @transform_2(%arg0: i32) -> (i32, i32) {
    %c0_i32 = arith.constant 0 : i32
    %c0_i32_0 = arith.constant 0 : i32
    return %arg0, %c0_i32 : i32, i32
  }
}

</mosaic_0001>

<llo_original>
// kernel: spatial_attention.1
$region0: #{spatial_attention.1}
  #allocation0 [shape = 'u32[]', space=smem, size = 0x4, offset = 0x4, fixed_abs, tag = 'smem constant byte address 0x4 - core index']
  #allocation1 [shape = 'u32[144,128]{1,0:T(1,128)}', space=vmem, size = 0x12000, scoped, tag = 'internal scratch']
  %s0 = inlined_call_operand.vmem [shape: f32[18], index: 0, kind: input, shape index: {}]
  %s1 = inlined_call_operand.vmem [shape: f32[8,4,256], index: 1, kind: input, shape index: {}]
  %s2 = inlined_call_operand.vmem [shape: f32[8,256], index: 2, kind: output, shape index: {}]
  %s3 = sld [smem:[#allocation0]]
  $region22: #{spatial_attention.1} parent=0
    _
  %s5 = ssub.s32 1, %s3
  %s6 = scalar_select 0, %s5, %s3
  $region1: #{spatial_attention.1} parent=0
    #allocation2 [shape = 'u8[512]{0}', space=smem, size = 0x200, scoped, tag = 'input window, operand 0, single buffered']
    #allocation3 [shape = 's32[1]{0}', space=sflag, size = 0x4, scoped, tag = 'scoped memory for spatial_attention.1']
    %7 = vsyncpa [#allocation3], 0
    // Predicated region
    $region2: #{spatial_attention.1} parent=1 // pred_check
      _
    $region3: #{spatial_attention.1} parent=1 // pred_check_branch
      %9 = sbr.rel (0) target = $region5
    $region4: #{spatial_attention.1} parent=1 // pred_region
      %s11 = ssub.s32 16, 16
      %12 = vsyncadd [#allocation3], %s11
      %s14 = sshll.u32 %s0, 4
      %s15 = int_to_ptr.vmem [resolvable:$true] %s14
      %17 = dma.vmem_to_smem %s15, 16, [#allocation2], [#allocation3]
    $region5: #{spatial_attention.1} parent=1 // pred_fallthru
      _
    // Predicated region
    $region6: #{spatial_attention.1} parent=1 // pred_check
      _
    $region7: #{spatial_attention.1} parent=1 // pred_check_branch
      %19 = sbr.rel (0) target = $region9
    $region8: #{spatial_attention.1} parent=1 // pred_region
      _
    $region9: #{spatial_attention.1} parent=1 // pred_fallthru
      _
    // Predicated region
    $region10: #{spatial_attention.1} parent=1 // pred_check
      _
    $region11: #{spatial_attention.1} parent=1 // pred_check_branch
      %21 = sbr.rel (0) target = $region13
    $region12: #{spatial_attention.1} parent=1 // pred_region
      %22 = dma.done [#allocation3], 16
    $region13: #{spatial_attention.1} parent=1 // pred_fallthru
      _
    %23 = sfence
    %v24 = vld [vmem:[%s1] ss:$4 sm:$0x3]
    %s25 = scalar_lea.vmem %s1, 8
    %v26 = vld [vmem:[%s25] ss:$4 sm:$0x3]
    %s27 = scalar_lea.vmem %s1, 16
    %v28 = vld [vmem:[%s27] ss:$4 sm:$0x3]
    %s29 = scalar_lea.vmem %s1, 24
    %v30 = vld [vmem:[%s29] ss:$4 sm:$0x3]
    %s31 = scalar_lea.vmem %s1, 32
    %v32 = vld [vmem:[%s31] ss:$4 sm:$0x3]
    %s33 = scalar_lea.vmem %s1, 40
    %v34 = vld [vmem:[%s33] ss:$4 sm:$0x3]
    %s35 = scalar_lea.vmem %s1, 48
    %v36 = vld [vmem:[%s35] ss:$4 sm:$0x3]
    %s37 = scalar_lea.vmem %s1, 56
    %v38 = vld [vmem:[%s37] ss:$4 sm:$0x3]
    %s39 = scalar_lea.vmem %s1, 1
    %v40 = vld [vmem:[%s39] ss:$4 sm:$0x3]
    %s41 = scalar_lea.vmem %s1, 9
    %v42 = vld [vmem:[%s41] ss:$4 sm:$0x3]
    %s43 = scalar_lea.vmem %s1, 17
    %v44 = vld [vmem:[%s43] ss:$4 sm:$0x3]
    %s45 = scalar_lea.vmem %s1, 25
    %v46 = vld [vmem:[%s45] ss:$4 sm:$0x3]
    %s47 = scalar_lea.vmem %s1, 33
    %v48 = vld [vmem:[%s47] ss:$4 sm:$0x3]
    %s49 = scalar_lea.vmem %s1, 41
    %v50 = vld [vmem:[%s49] ss:$4 sm:$0x3]
    %s51 = scalar_lea.vmem %s1, 49
    %v52 = vld [vmem:[%s51] ss:$4 sm:$0x3]
    %s53 = scalar_lea.vmem %s1, 57
    %v54 = vld [vmem:[%s53] ss:$4 sm:$0x3]
    %v55 = vadd.f32 %v24, %v40
    %v56 = vadd.f32 %v26, %v42
    %v57 = vadd.f32 %v28, %v44
    %v58 = vadd.f32 %v30, %v46
    %v59 = vadd.f32 %v32, %v48
    %v60 = vadd.f32 %v34, %v50
    %v61 = vadd.f32 %v36, %v52
    %v62 = vadd.f32 %v38, %v54
    %v63 = vmax.f32 %v24, %v40
    %v64 = vmax.f32 %v26, %v42
    %v65 = vmax.f32 %v28, %v44
    %v66 = vmax.f32 %v30, %v46
    %v67 = vmax.f32 %v32, %v48
    %v68 = vmax.f32 %v34, %v50
    %v69 = vmax.f32 %v36, %v52
    %v70 = vmax.f32 %v38, %v54
    %s71 = scalar_lea.vmem %s1, 2
    %v72 = vld [vmem:[%s71] ss:$4 sm:$0x3]
    %s73 = scalar_lea.vmem %s1, 10
    %v74 = vld [vmem:[%s73] ss:$4 sm:$0x3]
    %s75 = scalar_lea.vmem %s1, 18
    %v76 = vld [vmem:[%s75] ss:$4 sm:$0x3]
    %s77 = scalar_lea.vmem %s1, 26
    %v78 = vld [vmem:[%s77] ss:$4 sm:$0x3]
    %s79 = scalar_lea.vmem %s1, 34
    %v80 = vld [vmem:[%s79] ss:$4 sm:$0x3]
    %s81 = scalar_lea.vmem %s1, 42
    %v82 = vld [vmem:[%s81] ss:$4 sm:$0x3]
    %s83 = scalar_lea.vmem %s1, 50
    %v84 = vld [vmem:[%s83] ss:$4 sm:$0x3]
    %s85 = scalar_lea.vmem %s1, 58
    %v86 = vld [vmem:[%s85] ss:$4 sm:$0x3]
    %v87 = vadd.f32 %v55, %v72
    %v88 = vadd.f32 %v56, %v74
    %v89 = vadd.f32 %v57, %v76
    %v90 = vadd.f32 %v58, %v78
    %v91 = vadd.f32 %v59, %v80
    %v92 = vadd.f32 %v60, %v82
    %v93 = vadd.f32 %v61, %v84
    %v94 = vadd.f32 %v62, %v86
    %v95 = vmax.f32 %v63, %v72
    %v96 = vmax.f32 %v64, %v74
    %v97 = vmax.f32 %v65, %v76
    %v98 = vmax.f32 %v66, %v78
    %v99 = vmax.f32 %v67, %v80
    %v100 = vmax.f32 %v68, %v82
    %v101 = vmax.f32 %v69, %v84
    %v102 = vmax.f32 %v70, %v86
    %s103 = scalar_lea.vmem %s1, 3
    %v104 = vld [vmem:[%s103] ss:$4 sm:$0x3]
    %s105 = scalar_lea.vmem %s1, 11
    %v106 = vld [vmem:[%s105] ss:$4 sm:$0x3]
    %s107 = scalar_lea.vmem %s1, 19
    %v108 = vld [vmem:[%s107] ss:$4 sm:$0x3]
    %s109 = scalar_lea.vmem %s1, 27
    %v110 = vld [vmem:[%s109] ss:$4 sm:$0x3]
    %s111 = scalar_lea.vmem %s1, 35
    %v112 = vld [vmem:[%s111] ss:$4 sm:$0x3]
    %s113 = scalar_lea.vmem %s1, 43
    %v114 = vld [vmem:[%s113] ss:$4 sm:$0x3]
    %s115 = scalar_lea.vmem %s1, 51
    %v116 = vld [vmem:[%s115] ss:$4 sm:$0x3]
    %s117 = scalar_lea.vmem %s1, 59
    %v118 = vld [vmem:[%s117] ss:$4 sm:$0x3]
    %v119 = vadd.f32 %v87, %v104
    %v120 = vadd.f32 %v88, %v106
    %v121 = vadd.f32 %v89, %v108
    %v122 = vadd.f32 %v90, %v110
    %v123 = vadd.f32 %v91, %v112
    %v124 = vadd.f32 %v92, %v114
    %v125 = vadd.f32 %v93, %v116
    %v126 = vadd.f32 %v94, %v118
    %v127 = vmax.f32 %v95, %v104
    %v128 = vmax.f32 %v96, %v106
    %v129 = vmax.f32 %v97, %v108
    %v130 = vmax.f32 %v98, %v110
    %v131 = vmax.f32 %v99, %v112
    %v132 = vmax.f32 %v100, %v114
    %v133 = vmax.f32 %v101, %v116
    %v134 = vmax.f32 %v102, %v118
    %v135 = vlaneseq
    %v136 = vand.u32 %v135, 127
    %v137 = vadd.s32 %v136, 128
    %vm138 = vcmp.lt.s32.totalorder %v136, 0
    %v139 = vsub.s32 0, %v136
    %v140 = vsel %vm138, %v139, %v136
    %v141 = vshrl.u32 %v140, 4
    %v142 = vand.u32 %v140, 15
    %v143 = vsub.s32 0, %v142
    %v144 = vsel %vm138, %v143, %v142
    %vm145 = vcmp.lt.s32.totalorder %v137, 0
    %v146 = vsub.s32 0, %v137
    %v147 = vsel %vm145, %v146, %v137
    %v148 = vshrl.u32 %v147, 4
    %v149 = vand.u32 %v147, 15
    %v150 = vsub.s32 0, %v149
    %v151 = vsel %vm145, %v150, %v149
    %vm152 = vcmp.ne.s32.totalorder %v144, 0
    %vm153 = vcmp.ne.s32.totalorder %v151, 0
    %vm154 = vcmp.lt.s32.totalorder %v144, 0
    %vm155 = vcmp.lt.s32.totalorder %v151, 0
    %vm156 = vmand %vm154, %vm152
    %vm157 = vmand %vm155, %vm153
    %v158 = vadd.s32 %v144, 16
    %v159 = vadd.s32 %v151, 16
    %v160 = vsel %vm156, %v158, %v144
    %v161 = vsel %vm157, %v159, %v151
    %vm162 = vcmp.gt.s32.totalorder %v160, 0
    %vm163 = vcmp.gt.s32.totalorder %v161, 0
    %v164 = vsel %vm162, 1, 0
    %v165 = vsel %vm163, 1, 0
    %v166 = vcvt.s32.f32 %v164
    %v167 = vcvt.s32.f32 %v165
    %vm168 = vcmp.lt.s32.totalorder %v160, 15
    %vm169 = vcmp.lt.s32.totalorder %v161, 15
    %v170 = vsel %vm168, 1, 0
    %v171 = vsel %vm169, 1, 0
    %v172 = vcvt.s32.f32 %v170
    %v173 = vcvt.s32.f32 %v171
    %vm174 = vcmp.ge.s32.totalorder %v136, 16
    %vm175 = vcmp.ge.s32.totalorder %v137, 16
    %v176 = vsel %vm174, 1, 0
    %v177 = vsel %vm175, 1, 0
    %v178 = vcvt.s32.f32 %v176
    %v179 = vcvt.s32.f32 %v177
    %vm180 = vcmp.lt.s32.totalorder %v136, 240
    %vm181 = vcmp.lt.s32.totalorder %v137, 240
    %v182 = vsel %vm180, 1, 0
    %v183 = vsel %vm181, 1, 0
    %v184 = vcvt.s32.f32 %v182
    %v185 = vcvt.s32.f32 %v183
    %v186 = vmul.f32 %v178, %v166
    %v187 = vmul.f32 %v179, %v167
    %v188 = vmul.f32 %v178, %v172
    %v189 = vmul.f32 %v179, %v173
    %v190 = vmul.f32 %v184, %v166
    %v191 = vmul.f32 %v185, %v167
    %v192 = vmul.f32 %v184, %v172
    %v193 = vmul.f32 %v185, %v173
    %v202 = vcombine.low %v119, %v120
    %v203 = vcombine.low %v121, %v122
    %v204 = vcombine.low %v123, %v124
    %v205 = vcombine.low %v125, %v126
    %v207 = vunpack.c.l.s4 1966171168
    %v208 = vunpack.c.0.s8 %v207
    %v209 = vlaneseq
    %v210 = vshrl.u32 %v209, 7
    %v211 = vsub.s32 %v208, %v210
    %v212 = vrot.slane %v202, %v211
    %v214 = vunpack.c.l.s4 1966171168
    %v215 = vunpack.c.0.s8 %v214
    %v216 = vlaneseq
    %v217 = vshrl.u32 %v216, 7
    %v218 = vsub.s32 %v215, %v217
    %v219 = vrot.slane %v203, %v218
    %v221 = vunpack.c.l.s4 1966171168
    %v222 = vunpack.c.0.s8 %v221
    %v223 = vlaneseq
    %v224 = vshrl.u32 %v223, 7
    %v225 = vsub.s32 %v222, %v224
    %v226 = vrot.slane %v204, %v225
    %v228 = vunpack.c.l.s4 1966171168
    %v229 = vunpack.c.0.s8 %v228
    %v230 = vlaneseq
    %v231 = vshrl.u32 %v230, 7
    %v232 = vsub.s32 %v229, %v231
    %v233 = vrot.slane %v205, %v232
    %v234 = vcombine.low %v212, %v219
    %v235 = vcombine.high %v212, %v219
    %v236 = vcombine.low %v226, %v233
    %v237 = vcombine.high %v226, %v233
    %v239 = vunpack.c.l.s4 1966171168
    %v240 = vunpack.c.0.s8 %v239
    %v241 = vlaneseq
    %v242 = vshrl.u32 %v241, 7
    %v243 = vsub.s32 %v240, %v242
    %v244 = vrot.slane %v234, %v243
    %v246 = vunpack.c.l.s4 1966171168
    %v247 = vunpack.c.0.s8 %v246
    %v248 = vlaneseq
    %v249 = vshrl.u32 %v248, 7
    %v250 = vsub.s32 %v247, %v249
    %v251 = vrot.slane %v235, %v250
    %v253 = vunpack.c.l.s4 1966171168
    %v254 = vunpack.c.0.s8 %v253
    %v255 = vlaneseq
    %v256 = vshrl.u32 %v255, 7
    %v257 = vsub.s32 %v254, %v256
    %v258 = vrot.slane %v236, %v257
    %v260 = vunpack.c.l.s4 1966171168
    %v261 = vunpack.c.0.s8 %v260
    %v262 = vlaneseq
    %v263 = vshrl.u32 %v262, 7
    %v264 = vsub.s32 %v261, %v263
    %v265 = vrot.slane %v237, %v264
    %v266 = vcombine.low %v244, %v258
    %v267 = vcombine.low %v251, %v265
    %v278 = vcombine.low %v127, %v128
    %v279 = vcombine.low %v129, %v130
    %v280 = vcombine.low %v131, %v132
    %v281 = vcombine.low %v133, %v134
    %v283 = vunpack.c.l.s4 1966171168
    %v284 = vunpack.c.0.s8 %v283
    %v285 = vlaneseq
    %v286 = vshrl.u32 %v285, 7
    %v287 = vsub.s32 %v284, %v286
    %v288 = vrot.slane %v278, %v287
    %v290 = vunpack.c.l.s4 1966171168
    %v291 = vunpack.c.0.s8 %v290
    %v292 = vlaneseq
    %v293 = vshrl.u32 %v292, 7
    %v294 = vsub.s32 %v291, %v293
    %v295 = vrot.slane %v279, %v294
    %v297 = vunpack.c.l.s4 1966171168
    %v298 = vunpack.c.0.s8 %v297
    %v299 = vlaneseq
    %v300 = vshrl.u32 %v299, 7
    %v301 = vsub.s32 %v298, %v300
    %v302 = vrot.slane %v280, %v301
    %v304 = vunpack.c.l.s4 1966171168
    %v305 = vunpack.c.0.s8 %v304
    %v306 = vlaneseq
    %v307 = vshrl.u32 %v306, 7
    %v308 = vsub.s32 %v305, %v307
    %v309 = vrot.slane %v281, %v308
    %v310 = vcombine.low %v288, %v295
    %v311 = vcombine.high %v288, %v295
    %v312 = vcombine.low %v302, %v309
    %v313 = vcombine.high %v302, %v309
    %v315 = vunpack.c.l.s4 1966171168
    %v316 = vunpack.c.0.s8 %v315
    %v317 = vlaneseq
    %v318 = vshrl.u32 %v317, 7
    %v319 = vsub.s32 %v316, %v318
    %v320 = vrot.slane %v310, %v319
    %v322 = vunpack.c.l.s4 1966171168
    %v323 = vunpack.c.0.s8 %v322
    %v324 = vlaneseq
    %v325 = vshrl.u32 %v324, 7
    %v326 = vsub.s32 %v323, %v325
    %v327 = vrot.slane %v311, %v326
    %v329 = vunpack.c.l.s4 1966171168
    %v330 = vunpack.c.0.s8 %v329
    %v331 = vlaneseq
    %v332 = vshrl.u32 %v331, 7
    %v333 = vsub.s32 %v330, %v332
    %v334 = vrot.slane %v312, %v333
    %v336 = vunpack.c.l.s4 1966171168
    %v337 = vunpack.c.0.s8 %v336
    %v338 = vlaneseq
    %v339 = vshrl.u32 %v338, 7
    %v340 = vsub.s32 %v337, %v339
    %v341 = vrot.slane %v313, %v340
    %v342 = vcombine.low %v320, %v334
    %v343 = vcombine.low %v327, %v341
    %346 = vrot.lane.b32.xlu0 %v266, 17
    %v347 = vpop.permute.xlu0 %346
    %348 = vrot.lane.b32.xlu0 %v342, 17
    %v349 = vpop.permute.xlu0 %348
    %350 = vrot.lane.b32.xlu0 %v267, 17
    %v351 = vpop.permute.xlu0 %350
    %352 = vrot.lane.b32.xlu0 %v343, 17
    %v353 = vpop.permute.xlu0 %352
    %vm354 = vcmp.lt.s32.totalorder %v136, 17
    %v355 = vsel %vm354, %v347, %v351
    %v356 = vsel %vm354, %v349, %v353
    %v357 = vsel %vm354, %v351, %v347
    %v358 = vsel %vm354, %v353, %v349
    %s359 = sld [smem:[#allocation2]]
    %v360 = vstv %s359
    %v361 = vmul.f32 %v360, %v357
    %v362 = vmul.f32 %v360, %v355
    %s363 = sld [smem:[#allocation2 + $0x9]]
    %v364 = vstv %s363
    %v365 = vmul.f32 %v364, %v358
    %v366 = vmul.f32 %v364, %v356
    %v367 = vadd.f32 %v361, %v365
    %v368 = vadd.f32 %v362, %v366
    %v369 = vmul.f32 %v367, %v186
    %v370 = vmul.f32 %v368, %v187
    %v371 = vadd.f32 %v369, 0.0
    %v372 = vadd.f32 %v370, 0.0
    %373 = vrot.lane.b32.xlu0 %v266, 16
    %v374 = vpop.permute.xlu0 %373
    %375 = vrot.lane.b32.xlu0 %v342, 16
    %v376 = vpop.permute.xlu0 %375
    %377 = vrot.lane.b32.xlu0 %v267, 16
    %v378 = vpop.permute.xlu0 %377
    %379 = vrot.lane.b32.xlu0 %v343, 16
    %v380 = vpop.permute.xlu0 %379
    %vm381 = vcmp.lt.s32.totalorder %v136, 16
    %v382 = vsel %vm381, %v374, %v378
    %v383 = vsel %vm381, %v376, %v380
    %v384 = vsel %vm381, %v378, %v374
    %v385 = vsel %vm381, %v380, %v376
    %s386 = sld [smem:[#allocation2 + $0x1]]
    %v387 = vstv %s386
    %v388 = vmul.f32 %v387, %v384
    %v389 = vmul.f32 %v387, %v382
    %s390 = sld [smem:[#allocation2 + $0xa]]
    %v391 = vstv %s390
    %v392 = vmul.f32 %v391, %v385
    %v393 = vmul.f32 %v391, %v383
    %v394 = vadd.f32 %v388, %v392
    %v395 = vadd.f32 %v389, %v393
    %v396 = vmul.f32 %v394, %v178
    %v397 = vmul.f32 %v395, %v179
    %v398 = vadd.f32 %v371, %v396
    %v399 = vadd.f32 %v372, %v397
    %400 = vrot.lane.b32.xlu0 %v266, 15
    %v401 = vpop.permute.xlu0 %400
    %402 = vrot.lane.b32.xlu0 %v342, 15
    %v403 = vpop.permute.xlu0 %402
    %404 = vrot.lane.b32.xlu0 %v267, 15
    %v405 = vpop.permute.xlu0 %404
    %406 = vrot.lane.b32.xlu0 %v343, 15
    %v407 = vpop.permute.xlu0 %406
    %vm408 = vcmp.lt.s32.totalorder %v136, 15
    %v409 = vsel %vm408, %v401, %v405
    %v410 = vsel %vm408, %v403, %v407
    %v411 = vsel %vm408, %v405, %v401
    %v412 = vsel %vm408, %v407, %v403
    %s413 = sld [smem:[#allocation2 + $0x2]]
    %v414 = vstv %s413
    %v415 = vmul.f32 %v414, %v411
    %v416 = vmul.f32 %v414, %v409
    %s417 = sld [smem:[#allocation2 + $0xb]]
    %v418 = vstv %s417
    %v419 = vmul.f32 %v418, %v412
    %v420 = vmul.f32 %v418, %v410
    %v421 = vadd.f32 %v415, %v419
    %v422 = vadd.f32 %v416, %v420
    %v423 = vmul.f32 %v421, %v188
    %v424 = vmul.f32 %v422, %v189
    %v425 = vadd.f32 %v398, %v423
    %v426 = vadd.f32 %v399, %v424
    %427 = vrot.lane.b32.xlu0 %v266, 1
    %v428 = vpop.permute.xlu0 %427
    %429 = vrot.lane.b32.xlu0 %v342, 1
    %v430 = vpop.permute.xlu0 %429
    %431 = vrot.lane.b32.xlu0 %v267, 1
    %v432 = vpop.permute.xlu0 %431
    %433 = vrot.lane.b32.xlu0 %v343, 1
    %v434 = vpop.permute.xlu0 %433
    %vm435 = vcmp.lt.s32.totalorder %v136, 1
    %v436 = vsel %vm435, %v428, %v432
    %v437 = vsel %vm435, %v430, %v434
    %v438 = vsel %vm435, %v432, %v428
    %v439 = vsel %vm435, %v434, %v430
    %s440 = sld [smem:[#allocation2 + $0x3]]
    %v441 = vstv %s440
    %v442 = vmul.f32 %v441, %v438
    %v443 = vmul.f32 %v441, %v436
    %s444 = sld [smem:[#allocation2 + $0xc]]
    %v445 = vstv %s444
    %v446 = vmul.f32 %v445, %v439
    %v447 = vmul.f32 %v445, %v437
    %v448 = vadd.f32 %v442, %v446
    %v449 = vadd.f32 %v443, %v447
    %v450 = vmul.f32 %v448, %v166
    %v451 = vmul.f32 %v449, %v167
    %v452 = vadd.f32 %v425, %v450
    %v453 = vadd.f32 %v426, %v451
    %s454 = sld [smem:[#allocation2 + $0x4]]
    %v455 = vstv %s454
    %v456 = vmul.f32 %v455, %v266
    %v457 = vmul.f32 %v455, %v267
    %s458 = sld [smem:[#allocation2 + $0xd]]
    %v459 = vstv %s458
    %v460 = vmul.f32 %v459, %v342
    %v461 = vmul.f32 %v459, %v343
    %v462 = vadd.f32 %v456, %v460
    %v463 = vadd.f32 %v457, %v461
    %v464 = vadd.f32 %v452, %v462
    %v465 = vadd.f32 %v453, %v463
    %466 = vrot.lane.b32.xlu0 %v266, 127
    %v467 = vpop.permute.xlu0 %466
    %468 = vrot.lane.b32.xlu0 %v342, 127
    %v469 = vpop.permute.xlu0 %468
    %470 = vrot.lane.b32.xlu0 %v267, 127
    %v471 = vpop.permute.xlu0 %470
    %472 = vrot.lane.b32.xlu0 %v343, 127
    %v473 = vpop.permute.xlu0 %472
    %vm474 = vcmp.lt.s32.totalorder %v136, 127
    %v475 = vsel %vm474, %v467, %v471
    %v476 = vsel %vm474, %v469, %v473
    %v477 = vsel %vm474, %v471, %v467
    %v478 = vsel %vm474, %v473, %v469
    %s479 = sld [smem:[#allocation2 + $0x5]]
    %v480 = vstv %s479
    %v481 = vmul.f32 %v480, %v475
    %v482 = vmul.f32 %v480, %v477
    %s483 = sld [smem:[#allocation2 + $0xe]]
    %v484 = vstv %s483
    %v485 = vmul.f32 %v484, %v476
    %v486 = vmul.f32 %v484, %v478
    %v487 = vadd.f32 %v481, %v485
    %v488 = vadd.f32 %v482, %v486
    %v489 = vmul.f32 %v487, %v172
    %v490 = vmul.f32 %v488, %v173
    %v491 = vadd.f32 %v464, %v489
    %v492 = vadd.f32 %v465, %v490
    %493 = vrot.lane.b32.xlu0 %v266, 113
    %v494 = vpop.permute.xlu0 %493
    %495 = vrot.lane.b32.xlu0 %v342, 113
    %v496 = vpop.permute.xlu0 %495
    %497 = vrot.lane.b32.xlu0 %v267, 113
    %v498 = vpop.permute.xlu0 %497
    %499 = vrot.lane.b32.xlu0 %v343, 113
    %v500 = vpop.permute.xlu0 %499
    %vm501 = vcmp.lt.s32.totalorder %v136, 113
    %v502 = vsel %vm501, %v494, %v498
    %v503 = vsel %vm501, %v496, %v500
    %v504 = vsel %vm501, %v498, %v494
    %v505 = vsel %vm501, %v500, %v496
    %s506 = sld [smem:[#allocation2 + $0x6]]
    %v507 = vstv %s506
    %v508 = vmul.f32 %v507, %v502
    %v509 = vmul.f32 %v507, %v504
    %s510 = sld [smem:[#allocation2 + $0xf]]
    %v511 = vstv %s510
    %v512 = vmul.f32 %v511, %v503
    %v513 = vmul.f32 %v511, %v505
    %v514 = vadd.f32 %v508, %v512
    %v515 = vadd.f32 %v509, %v513
    %v516 = vmul.f32 %v514, %v190
    %v517 = vmul.f32 %v515, %v191
    %v518 = vadd.f32 %v491, %v516
    %v519 = vadd.f32 %v492, %v517
    %520 = vrot.lane.b32.xlu0 %v266, 112
    %v521 = vpop.permute.xlu0 %520
    %522 = vrot.lane.b32.xlu0 %v342, 112
    %v523 = vpop.permute.xlu0 %522
    %524 = vrot.lane.b32.xlu0 %v267, 112
    %v525 = vpop.permute.xlu0 %524
    %526 = vrot.lane.b32.xlu0 %v343, 112
    %v527 = vpop.permute.xlu0 %526
    %vm528 = vcmp.lt.s32.totalorder %v136, 112
    %v529 = vsel %vm528, %v521, %v525
    %v530 = vsel %vm528, %v523, %v527
    %v531 = vsel %vm528, %v525, %v521
    %v532 = vsel %vm528, %v527, %v523
    %s533 = sld [smem:[#allocation2 + $0x7]]
    %v534 = vstv %s533
    %v535 = vmul.f32 %v534, %v529
    %v536 = vmul.f32 %v534, %v531
    %s537 = sld [smem:[#allocation2 + $0x10]]
    %v538 = vstv %s537
    %v539 = vmul.f32 %v538, %v530
    %v540 = vmul.f32 %v538, %v532
    %v541 = vadd.f32 %v535, %v539
    %v542 = vadd.f32 %v536, %v540
    %v543 = vmul.f32 %v541, %v184
    %v544 = vmul.f32 %v542, %v185
    %v545 = vadd.f32 %v518, %v543
    %v546 = vadd.f32 %v519, %v544
    %547 = vrot.lane.b32.xlu0 %v266, 111
    %v548 = vpop.permute.xlu0 %547
    %549 = vrot.lane.b32.xlu0 %v342, 111
    %v550 = vpop.permute.xlu0 %549
    %551 = vrot.lane.b32.xlu0 %v267, 111
    %v552 = vpop.permute.xlu0 %551
    %553 = vrot.lane.b32.xlu0 %v343, 111
    %v554 = vpop.permute.xlu0 %553
    %vm555 = vcmp.lt.s32.totalorder %v136, 111
    %v556 = vsel %vm555, %v548, %v552
    %v557 = vsel %vm555, %v550, %v554
    %v558 = vsel %vm555, %v552, %v548
    %v559 = vsel %vm555, %v554, %v550
    %s560 = sld [smem:[#allocation2 + $0x8]]
    %v561 = vstv %s560
    %v562 = vmul.f32 %v561, %v556
    %v563 = vmul.f32 %v561, %v558
    %s564 = sld [smem:[#allocation2 + $0x11]]
    %v565 = vstv %s564
    %v566 = vmul.f32 %v565, %v557
    %v567 = vmul.f32 %v565, %v559
    %v568 = vadd.f32 %v562, %v566
    %v569 = vadd.f32 %v563, %v567
    %v570 = vmul.f32 %v568, %v192
    %v571 = vmul.f32 %v569, %v193
    %v572 = vadd.f32 %v545, %v570
    %v573 = vadd.f32 %v546, %v571
    %v574 = vxor.u32 %v572, 2147483648
    %v575 = vxor.u32 %v573, 2147483648
    %v576 = vmul.f32 %v574, 1.442695
    %v577 = vpow.pop %v576
    %v578 = vmul.f32 %v575, 1.442695
    %v579 = vpow.pop %v578
    %v580 = vadd.f32 %v577, 1.0
    %v581 = vadd.f32 %v579, 1.0
    %v582 = vrcp.pop %v580
    %v583 = vmul.f32 1.0, %v582
    %v584 = vrcp.pop %v581
    %v585 = vmul.f32 1.0, %v584
    %586 = vst [vmem:[%s2] sm:$0xff] %v583
    %587 = vst [vmem:[%s2 + $0x8] sm:$0xff] %v585
    // Predicated region
    $region14: #{spatial_attention.1} parent=1 // pred_check
      _
    $region15: #{spatial_attention.1} parent=1 // pred_check_branch
      %589 = sbr.rel (0) target = $region17
    $region16: #{spatial_attention.1} parent=1 // pred_region
      _
    $region17: #{spatial_attention.1} parent=1 // pred_fallthru
      _
    // Predicated region
    $region18: #{spatial_attention.1} parent=1 // pred_check
      _
    $region19: #{spatial_attention.1} parent=1 // pred_check_branch
      %591 = sbr.rel (0) target = $region21
    $region20: #{spatial_attention.1} parent=1 // pred_region
      _
    $region21: #{spatial_attention.1} parent=1 // pred_fallthru
      _
    %592 = vsyncpa [#allocation3], 1

</llo_original>
